<compile_context>
chip_gen: v6e
topology: v6e:2x2x1
jax: 0.10.0
libtpu: 0.0.40
codegen_flags: <defaults>
</compile_context>

<pallas_src>
import functools

import jax
import jax.numpy as jnp
from jax.experimental import pallas as pl
from jax.experimental.pallas import tpu as pltpu  # noqa: F401  (TPU backend assumed)


def _linear_observer_kernel(obs_ref, w_ref, b_ref, out_ref):
    # obs_ref: (1, D)  w_ref: (2, D) (pre-scaled)  b_ref: (2, 1) (pre-scaled)  out_ref: (2, 1)
    obs = obs_ref[...]                                   # (1, D), lane-dense
    w = w_ref[...]                                       # (2, D), lane-dense
    z = jnp.sum(obs * w, axis=-1, keepdims=True)         # VPU mul + XLU lane reduce -> (2, 1)
    z = jnp.maximum(z + b_ref[...], 0.0)                 # bias + ReLU (scale already folded in)
    out_ref[...] = jnp.round(z)                          # half-to-even, matches torch.round


def prepare_params(weight, bias, grid_size, window_size):
    """One-time parameter preparation (NOT in the per-call hot path).

    weight: (2, D) float32 (native PyTorch nn.Linear layout, no transpose needed)
    bias:   (2,)   float32
    Folds scale = grid_h - window_size into both (requires scale >= 0 so that
    ReLU(z) * scale == ReLU(z * scale))."""
    grid_h, _ = grid_size
    scale = float(grid_h - window_size)
    assert scale >= 0.0, "scale folding into weights requires grid_h - window_size >= 0"
    w_prepped = (weight * scale).astype(jnp.float32)               # (2, D)
    b_prepped = (bias * scale).reshape(2, 1).astype(jnp.float32)   # (2, 1)
    return w_prepped, b_prepped


@functools.partial(jax.jit, static_argnames=("grid_size",))
def linear_observer_forward(observations, w_prepped, b_prepped, grid_size):
    """observations: (grid_h, grid_w) float32 -> returns (2,) array holding (x, y)."""
    grid_h, grid_w = grid_size
    D = grid_h * grid_w

    obs_flat = observations.reshape(1, D).astype(jnp.float32)  # contiguous reshape, fuses

    out = pl.pallas_call(
        _linear_observer_kernel,
        out_shape=jax.ShapeDtypeStruct((2, 1), jnp.float32),
        in_specs=[
            pl.BlockSpec((1, D), lambda: (0, 0)),   # full-array block (D multiple of 128)
            pl.BlockSpec((2, D), lambda: (0, 0)),   # full-array block, native (2, D) layout
            pl.BlockSpec((2, 1), lambda: (0, 0)),   # tiny bias tile
        ],
        out_specs=pl.BlockSpec((2, 1), lambda: (0, 0)),
    )(obs_flat, w_prepped, b_prepped)

    return out[:, 0]   # (2,) = (x, y); single slice, fused inside the jit


if __name__ == "__main__":
    # Module config: grid_size = (16, 16), window_size = 4  -> D = 256
    grid_size = (16, 16)
    window_size = 4
    D = grid_size[0] * grid_size[1]

    key = jax.random.PRNGKey(0)
    k_obs, k_w, k_b = jax.random.split(key, 3)

    # Deterministic parameter init mimicking torch.nn.Linear (uniform(-1/sqrt(D), 1/sqrt(D)))
    bound = 1.0 / (D ** 0.5)
    weight = jax.random.uniform(k_w, (2, D), dtype=jnp.float32, minval=-bound, maxval=bound)
    bias = jax.random.uniform(k_b, (2,), dtype=jnp.float32, minval=-bound, maxval=bound)

    observations = jax.random.uniform(k_obs, grid_size, dtype=jnp.float32)

    # One-time parameter prep (transpose-free, scale folded in), then the hot-path call.
    w_prepped, b_prepped = prepare_params(weight, bias, grid_size, window_size)
    xy = linear_observer_forward(observations, w_prepped, b_prepped, grid_size)
    jax.block_until_ready(xy)
    x, y = xy[0], xy[1]

    # Pure-JAX reference check (original torch-ordered math).
    z_ref = jnp.maximum(observations.reshape(-1) @ weight.T + bias, 0.0)
    ref = jnp.round(z_ref * (grid_size[0] - window_size))
    assert jnp.allclose(jnp.stack([x, y]), ref, atol=1e-5), (x, y, ref)

    print("KERNEL_OK")
</pallas_src>

<mosaic_0001>
module attributes {stable_mosaic.version = 11 : i64} {
  func.func @_linear_observer_kernel(%arg0: memref<1x256xf32, #tpu.memory_space<vmem>>, %arg1: memref<2x256xf32, #tpu.memory_space<vmem>>, %arg2: memref<2x1xf32, #tpu.memory_space<vmem>>, %arg3: memref<2x1xf32, #tpu.memory_space<vmem>>) attributes {dimension_semantics = [], scalar_prefetch = 0 : i64, scratch_operands = 0 : i64, tpu.core_type = #tpu.core_type<tc>} {
    %c0 = arith.constant 0 : index
    %c0_0 = arith.constant 0 : index
    %0 = vector.load %arg0[%c0, %c0_0] : memref<1x256xf32, #tpu.memory_space<vmem>>, vector<1x256xf32>
    %c0_1 = arith.constant 0 : index
    %c0_2 = arith.constant 0 : index
    %1 = vector.load %arg1[%c0_1, %c0_2] : memref<2x256xf32, #tpu.memory_space<vmem>>, vector<2x256xf32>
    %2 = vector.broadcast %0 : vector<1x256xf32> to vector<2x256xf32>
    %3 = arith.mulf %2, %1 : vector<2x256xf32>
    %cst = arith.constant dense<0.000000e+00> : vector<2xf32>
    %4 = vector.multi_reduction <add>, %3, %cst [1] : vector<2x256xf32> to vector<2xf32>
    %5 = vector.shape_cast %4 : vector<2xf32> to vector<2x1xf32>
    %c0_3 = arith.constant 0 : index
    %c0_4 = arith.constant 0 : index
    %6 = vector.load %arg2[%c0_3, %c0_4] : memref<2x1xf32, #tpu.memory_space<vmem>>, vector<2x1xf32>
    %7 = arith.addf %5, %6 : vector<2x1xf32>
    %cst_5 = arith.constant 0.000000e+00 : f32
    %8 = vector.broadcast %cst_5 : f32 to vector<2x1xf32>
    %9 = arith.maximumf %7, %8 : vector<2x1xf32>
    %10 = math.roundeven %9 : vector<2x1xf32>
    %c0_6 = arith.constant 0 : index
    %c0_7 = arith.constant 0 : index
    %11 = vector.load %arg3[%c0_6, %c0_7] : memref<2x1xf32, #tpu.memory_space<vmem>>, vector<2x1xf32>
    tpu.vector_store %arg3[%c0_6, %c0_7], %10 {strides = array<i32>} : memref<2x1xf32, #tpu.memory_space<vmem>>, vector<2x1xf32>,
    return
  }
}

</mosaic_0001>

<llo_original>
// kernel: linear_observer_forward.1
$region0: #{linear_observer_forward.1}
  #allocation0 [shape = 'u32[]', space=smem, size = 0x4, offset = 0x4, fixed_abs, tag = 'smem constant byte address 0x4 - core index']
  #allocation1 [shape = 'u32[144,128]{1,0:T(1,128)}', space=vmem, size = 0x12000, scoped, tag = 'internal scratch']
  %s0 = inlined_call_operand.vmem [shape: f32[1,256], index: 0, kind: input, shape index: {}]
  %s1 = inlined_call_operand.vmem [shape: f32[2,256], index: 1, kind: input, shape index: {}]
  %s2 = inlined_call_operand.vmem [shape: f32[2,1], index: 2, kind: input, shape index: {}]
  %s3 = inlined_call_operand.vmem [shape: f32[2,1], index: 3, kind: output, shape index: {}]
  %s4 = sld [smem:[#allocation0]]
  $region22: #{linear_observer_forward.1} parent=0
    _
  %s6 = ssub.s32 1, %s4
  %s7 = scalar_select 0, %s6, %s4
  // Predicated region
  $region2: #{linear_observer_forward.1} parent=0 // pred_check
    _
  $region3: #{linear_observer_forward.1} parent=0 // pred_check_branch
    %9 = sbr.rel (0) target = $region5
  $region4: #{linear_observer_forward.1} parent=0 // pred_region
    _
  $region5: #{linear_observer_forward.1} parent=0 // pred_fallthru
    _
  // Predicated region
  $region6: #{linear_observer_forward.1} parent=0 // pred_check
    _
  $region7: #{linear_observer_forward.1} parent=0 // pred_check_branch
    %11 = sbr.rel (0) target = $region9
  $region8: #{linear_observer_forward.1} parent=0 // pred_region
    _
  $region9: #{linear_observer_forward.1} parent=0 // pred_fallthru
    _
  // Predicated region
  $region10: #{linear_observer_forward.1} parent=0 // pred_check
    _
  $region11: #{linear_observer_forward.1} parent=0 // pred_check_branch
    %13 = sbr.rel (0) target = $region13
  $region12: #{linear_observer_forward.1} parent=0 // pred_region
    _
  $region13: #{linear_observer_forward.1} parent=0 // pred_fallthru
    _
  %v14 = vld [vmem:[%s0] sm:$0x3]
  %v15 = vld [vmem:[%s1] sm:$0xf]
  %v17 = vlaneseq
  %v18 = vshrl.u32 %v17, 7
  %v19 = vsub.s32 0, %v18
  %v20 = vrot.slane %v14, %v19
  %v21 = vlaneseq
  %v22 = vshrl.u32 %v21, 7
  %v23 = vsub.s32 1, %v22
  %v24 = vrot.slane %v14, %v23
  %v29 = vunpack.c.l.s4 1983009808
  %v30 = vunpack.c.0.s8 %v29
  %v31 = vlaneseq
  %v32 = vshrl.u32 %v31, 7
  %v33 = vsub.s32 %v30, %v32
  %v34 = vrot.slane %v15, %v33
  %v35 = vcombine.high %v34, %v34
  %v38 = vmul.f32 %v20, %v34
  %v39 = vmul.f32 %v24, %v35
  %vm40 = vcmask 1041408
  %v41 = vsel %vm40, %v38, 0.0
  %v42 = vsel %vm40, %v39, 0.0
  %v43 = vadd.f32 %v41, %v42
  %44 = vadd.xlane.f32.xlu0 %v43
  %v45 = vpop.xlane.xlu0 %44
  %v46 = vld [vmem:[%s2] sm:$0x3]
  %v47 = vadd.f32 %v45, %v46
  %v48 = vmax.f32 %v47, 0.0
  %v49 = vround.ne.pseudo %v48
  %vm50 = vcmask 1024
  %51 = vst.msk [vmem:[%s3] sm:$0x3] %vm50, %v49
  // Predicated region
  $region14: #{linear_observer_forward.1} parent=0 // pred_check
    _
  $region15: #{linear_observer_forward.1} parent=0 // pred_check_branch
    %53 = sbr.rel (0) target = $region17
  $region16: #{linear_observer_forward.1} parent=0 // pred_region
    _
  $region17: #{linear_observer_forward.1} parent=0 // pred_fallthru
    _
  // Predicated region
  $region18: #{linear_observer_forward.1} parent=0 // pred_check
    _
  $region19: #{linear_observer_forward.1} parent=0 // pred_check_branch
    %55 = sbr.rel (0) target = $region21
  $region20: #{linear_observer_forward.1} parent=0 // pred_region
    _
  $region21: #{linear_observer_forward.1} parent=0 // pred_fallthru
    _

</llo_original>
